<compile_context>
chip_gen: v6e
topology: v6e:2x2x1
jax: 0.10.0
libtpu: 0.0.40
codegen_flags: <defaults>
</compile_context>

<pallas_src>
import functools

import jax
import jax.numpy as jnp
from jax.experimental import pallas as pl
from jax.experimental.pallas import tpu as pltpu


EPS = 1e-10

# Conservative pipelined-VMEM budget (in + out, double-buffered).  8 MiB fits
# comfortably under v5e's 16 MiB scoped default and v7x's 32 MiB scoped / 64
# MiB physical VMEM, so no vmem_limit_bytes override is needed.
_VMEM_BUDGET_BYTES = 8 * 1024 * 1024
_MAX_TILE = 4096  # keep the grid populated enough to shard across v7x's 2 TCs


def _l2norm_kernel(w_ref, x_ref, o_ref):
    # x_ref: (1, C, T) block; w_ref: (1, C, 1) full weight.
    x = x_ref[...].astype(jnp.float32)                        # (1, C, T)
    w = w_ref[...].astype(jnp.float32)                        # (1, C, 1)
    sq_sum = jnp.sum(x * x, axis=1, keepdims=True)            # (1, 1, T)
    norm = jnp.sqrt(sq_sum) + EPS                             # (1, 1, T)
    inv = pl.reciprocal(norm, approx=False)                   # per-column, exact
    # Two VPU muls per element; the divide only happens over T columns.
    o_ref[...] = (x * inv * w).astype(o_ref.dtype)


def _pick_spatial_tile(hw_pad, n_channels, itemsize):
    """Largest multiple of 128 dividing hw_pad within the VMEM budget."""
    # bytes per grid step ~ 2 (double-buffer) * 2 (in + out) * C * t * itemsize
    cap = _VMEM_BUDGET_BYTES // (4 * n_channels * itemsize)
    cap = max(128, min(cap, _MAX_TILE, hw_pad))
    cap -= cap % 128
    for cand in range(cap, 127, -128):
        if hw_pad % cand == 0:
            return cand
    return 128


@jax.jit
def l2norm(x_nchw, weight):
    """x_nchw: (N, C, H, W); weight: (C,). Returns same shape/dtype as x."""
    N, C, H, W = x_nchw.shape
    HW = H * W
    x3 = x_nchw.reshape(N, C, HW)          # (batch, channel, spatial)
    w3 = weight.reshape(1, C, 1)

    # Pad spatial axis to a multiple of 128 so all stores are lane-dense.
    HW_pad = pl.cdiv(HW, 128) * 128
    if HW_pad != HW:
        # Zero padding is safe: padded columns produce 0 output and are sliced off.
        x3 = jnp.pad(x3, ((0, 0), (0, 0), (0, HW_pad - HW)))

    t = _pick_spatial_tile(HW_pad, C, jnp.dtype(x_nchw.dtype).itemsize)
    grid = (N, HW_pad // t)

    out3 = pl.pallas_call(
        _l2norm_kernel,
        out_shape=jax.ShapeDtypeStruct((N, C, HW_pad), x_nchw.dtype),
        grid_spec=pltpu.PrefetchScalarGridSpec(
            num_scalar_prefetch=0,
            grid=grid,
            in_specs=[
                pl.BlockSpec((1, C, 1), lambda n, s: (0, 0, 0)),   # weight (full)
                pl.BlockSpec((1, C, t), lambda n, s: (n, 0, s)),   # x block
            ],
            out_specs=pl.BlockSpec((1, C, t), lambda n, s: (n, 0, s)),
        ),
        compiler_params=pltpu.CompilerParams(
            dimension_semantics=("parallel", "parallel")),
    )(w3, x3)

    if HW_pad != HW:
        out3 = out3[:, :, :HW]
    return out3.reshape(N, C, H, W)


def l2norm_reference(x, weight, eps=EPS):
    norm = jnp.sqrt(jnp.sum(x.astype(jnp.float32) ** 2, axis=1, keepdims=True)) + eps
    out = weight.reshape(1, -1, 1, 1) * (x.astype(jnp.float32) / norm)
    return out.astype(x.dtype)


if __name__ == "__main__":
    # Deterministic parameter init (matches init.constant(self.weight, scale)).
    n_channels = 4
    scale = 20.0
    weight = jnp.full((n_channels,), scale, dtype=jnp.float32)

    key = jax.random.PRNGKey(0)
    x = jax.random.normal(key, (2, n_channels, 16, 16), dtype=jnp.float32)

    out = l2norm(x, weight)
    out = jax.block_until_ready(out)

    ref = l2norm_reference(x, weight)
    assert out.shape == x.shape and out.dtype == x.dtype
    assert jnp.allclose(out, ref, atol=1e-5, rtol=1e-5), "mismatch vs reference"

    print("KERNEL_OK")
</pallas_src>

<mosaic_0001>
module attributes {stable_mosaic.version = 11 : i64} {
  func.func @_l2norm_kernel(%arg0: i32, %arg1: i32, %arg2: memref<1x4x1xf32, #tpu.memory_space<vmem>>, %arg3: memref<1x4x256xf32, #tpu.memory_space<vmem>>, %arg4: memref<1x4x256xf32, #tpu.memory_space<vmem>>) attributes {dimension_semantics = [#tpu.dimension_semantics<parallel>, #tpu.dimension_semantics<parallel>], iteration_bounds = array<i64: 2, 1>, scalar_prefetch = 0 : i64, scratch_operands = 0 : i64, tpu.core_type = #tpu.core_type<tc>, window_params = [{pipeline_mode = #tpu.pipeline_mode<synchronous>, transform_indices = @transform_0, window_bounds = array<i64: 1, 4, 1>}, {transform_indices = @transform_1, window_bounds = array<i64: 1, 4, 256>}, {transform_indices = @transform_2, window_bounds = array<i64: 1, 4, 256>}]} {
    %c0 = arith.constant 0 : index
    %c0_0 = arith.constant 0 : index
    %c0_1 = arith.constant 0 : index
    %0 = vector.load %arg3[%c0, %c0_0, %c0_1] : memref<1x4x256xf32, #tpu.memory_space<vmem>>, vector<1x4x256xf32>
    %c0_2 = arith.constant 0 : index
    %c0_3 = arith.constant 0 : index
    %c0_4 = arith.constant 0 : index
    %1 = vector.load %arg2[%c0_2, %c0_3, %c0_4] : memref<1x4x1xf32, #tpu.memory_space<vmem>>, vector<1x4x1xf32>
    %2 = arith.mulf %0, %0 : vector<1x4x256xf32>
    %cst = arith.constant dense<0.000000e+00> : vector<1x256xf32>
    %3 = vector.multi_reduction <add>, %2, %cst [1] : vector<1x4x256xf32> to vector<1x256xf32>
    %4 = vector.shape_cast %3 : vector<1x256xf32> to vector<1x1x256xf32>
    %5 = math.sqrt %4 : vector<1x1x256xf32>
    %cst_5 = arith.constant 1.000000e-10 : f32
    %6 = vector.broadcast %cst_5 : f32 to vector<1x1x256xf32>
    %7 = arith.addf %5, %6 : vector<1x1x256xf32>
    %8 = tpu.reciprocal %7 : vector<1x1x256xf32> -> vector<1x1x256xf32>
    %9 = vector.broadcast %8 : vector<1x1x256xf32> to vector<1x4x256xf32>
    %10 = arith.mulf %0, %9 : vector<1x4x256xf32>
    %11 = vector.broadcast %1 : vector<1x4x1xf32> to vector<1x4x256xf32>
    %12 = arith.mulf %10, %11 : vector<1x4x256xf32>
    %c0_6 = arith.constant 0 : index
    %c0_7 = arith.constant 0 : index
    %c0_8 = arith.constant 0 : index
    %13 = vector.load %arg4[%c0_6, %c0_7, %c0_8] : memref<1x4x256xf32, #tpu.memory_space<vmem>>, vector<1x4x256xf32>
    tpu.vector_store %arg4[%c0_6, %c0_7, %c0_8], %12 {strides = array<i32>} : memref<1x4x256xf32, #tpu.memory_space<vmem>>, vector<1x4x256xf32>,
    return
  }
  func.func @transform_0(%arg0: i32, %arg1: i32) -> (i32, i32, i32) {
    %c0_i32 = arith.constant 0 : i32
    %c0_i32_0 = arith.constant 0 : i32
    %c0_i32_1 = arith.constant 0 : i32
    %c0_i32_2 = arith.constant 0 : i32
    return %c0_i32, %c0_i32_0, %c0_i32_1 : i32, i32, i32
  }
  func.func @transform_1(%arg0: i32, %arg1: i32) -> (i32, i32, i32) {
    %c0_i32 = arith.constant 0 : i32
    %c0_i32_0 = arith.constant 0 : i32
    return %arg0, %c0_i32, %arg1 : i32, i32, i32
  }
  func.func @transform_2(%arg0: i32, %arg1: i32) -> (i32, i32, i32) {
    %c0_i32 = arith.constant 0 : i32
    %c0_i32_0 = arith.constant 0 : i32
    return %arg0, %c0_i32, %arg1 : i32, i32, i32
  }
}

</mosaic_0001>

<llo_original>
// kernel: l2norm.1
$region0: #{l2norm.1}
  #allocation0 [shape = 'u32[]', space=smem, size = 0x4, offset = 0x4, fixed_abs, tag = 'smem constant byte address 0x4 - core index']
  #allocation1 [shape = 'u32[144,128]{1,0:T(1,128)}', space=vmem, size = 0x12000, scoped, tag = 'internal scratch']
  %s0 = inlined_call_operand.vmem [shape: f32[1,4,1], index: 0, kind: input, shape index: {}]
  %s1 = inlined_call_operand.vmem [shape: f32[2,4,256], index: 1, kind: input, shape index: {}]
  %s2 = inlined_call_operand.vmem [shape: f32[2,4,256], index: 2, kind: output, shape index: {}]
  %s3 = sld [smem:[#allocation0]]
  $region41: #{l2norm.1} parent=0
    _
  %s5 = ssub.s32 1, %s3
  %s6 = scalar_select 0, %s5, %s3
  loop: start=0, step=1, limit=4
  $region2: #{l2norm.1} parent=0 // loop_pre_header
    _
  $region3: #{l2norm.1} parent=0 // loop_header
    %s8 = sphi 0, %s12
    %p9 = scmp.ge.s32.totalorder %s8, 4
    %s15 = sphi 0, %s27
    %s16 = sphi 0, %s23
    %s17 = sphi 0, %s15
    %s18 = sphi 0, %s16
    %s19 = sphi 0, %s17
    %s20 = sphi 0, %s18
    %s28 = sphi 0, %s28
    %s30 = sphi 0, %s28
    %s31 = sphi 0, %s30
    %s45 = sphi 0, %s31
    %s53 = sphi 0, %s55
    %s56 = sphi 0, %s53
    %s57 = sphi 0, %s56
    %s73 = sphi 0, %s57
    %s81 = sphi 0, %s83
    %s84 = sphi 0, %s81
    %s85 = sphi 0, %s84
    %s101 = sphi 0, %s85
  $region4: #{l2norm.1} parent=0 // loop_header_branch
    %11 = sbr.rel (%p9) target = $region8
  $region5: #{l2norm.1} parent=0 // loop_body
    %s13 = ssub.s32 %s8, 1
    %s14 = ssub.s32 %s8, 2
    %s21 = sadd.s32 1, %s16
    %p22 = scmp.ge.s32.totalorder %s21, 1
    %s23 = scalar_select %p22, 0, %s21
    %s24 = sadd.s32 1, %s15
    %s25 = scalar_select %p22, %s24, %s15
    %p26 = scmp.ge.s32.totalorder %s25, 2
    %s27 = scalar_select %p26, 0, %s25
    %s29 = sadd.s32 %s28, 1
    %p32 = scmp.eq.s32.totalorder %s8, 1
    %p33 = scmp.ne.s32.totalorder %s28, %s30
    %p34 = scmp.eq.s32.totalorder %s8, 0
    %p35 = por %p33, %p34
    %p36 = scmp.ne.s32.totalorder %s28, %s30
    %p37 = scmp.eq.s32.totalorder %s13, 1
    %p38 = por %p36, %p37
    %p39 = scmp.ne.s32.totalorder %s30, %s31
    %p40 = scmp.eq.s32.totalorder %s13, 0
    %p41 = por %p39, %p40
    %p42 = scmp.ne.s32.totalorder %s30, %s31
    %p43 = scmp.eq.s32.totalorder %s14, 1
    %p44 = por %p42, %p43
    %p46 = scmp.ne.s32.totalorder %s31, %s45
    %p47 = scmp.eq.s32.totalorder %s14, 0
    %p48 = por %p46, %p47
    %s49 = ssub.s32 %s15, %s27
    %s50 = ssub.s32 %s16, %s23
    %s51 = sor.u32 %s49, %s50
    %p52 = scmp.eq.s32.totalorder %s51, 0
    %s54 = sadd.s32 %s53, 1
    %s55 = scalar_select %p52, %s53, %s54
    %p58 = pneg %p52
    %p59 = scmp.eq.s32.totalorder %s8, 1
    %p60 = por %p58, %p59
    %p61 = scmp.ne.s32.totalorder %s53, %s56
    %p62 = scmp.eq.s32.totalorder %s8, 0
    %p63 = por %p61, %p62
    %p64 = scmp.ne.s32.totalorder %s53, %s56
    %p65 = scmp.eq.s32.totalorder %s13, 1
    %p66 = por %p64, %p65
    %p67 = scmp.ne.s32.totalorder %s56, %s57
    %p68 = scmp.eq.s32.totalorder %s13, 0
    %p69 = por %p67, %p68
    %p70 = scmp.ne.s32.totalorder %s56, %s57
    %p71 = scmp.eq.s32.totalorder %s14, 1
    %p72 = por %p70, %p71
    %p74 = scmp.ne.s32.totalorder %s57, %s73
    %p75 = scmp.eq.s32.totalorder %s14, 0
    %p76 = por %p74, %p75
    %s77 = ssub.s32 %s15, %s27
    %s78 = ssub.s32 %s16, %s23
    %s79 = sor.u32 %s77, %s78
    %p80 = scmp.eq.s32.totalorder %s79, 0
    %s82 = sadd.s32 %s81, 1
    %s83 = scalar_select %p80, %s81, %s82
    %p86 = pneg %p80
    %p87 = scmp.eq.s32.totalorder %s8, 1
    %p88 = por %p86, %p87
    %p89 = scmp.ne.s32.totalorder %s81, %s84
    %p90 = scmp.eq.s32.totalorder %s8, 0
    %p91 = por %p89, %p90
    %p92 = scmp.ne.s32.totalorder %s81, %s84
    %p93 = scmp.eq.s32.totalorder %s13, 1
    %p94 = por %p92, %p93
    %p95 = scmp.ne.s32.totalorder %s84, %s85
    %p96 = scmp.eq.s32.totalorder %s13, 0
    %p97 = por %p95, %p96
    %p98 = scmp.ne.s32.totalorder %s84, %s85
    %p99 = scmp.eq.s32.totalorder %s14, 1
    %p100 = por %p98, %p99
    %p102 = scmp.ne.s32.totalorder %s85, %s101
    %p103 = scmp.eq.s32.totalorder %s14, 0
    %p104 = por %p102, %p103
    %p105 = scmp.le.s32.totalorder 1, %s8
    %p106 = scmp.lt.s32.totalorder %s8, 3
    %p107 = pnand %p105, %p106
    %p108 = pneg %p107
    // Predicated region
    $region9: #{l2norm.1} parent=5 // pred_check
      _
    $region10: #{l2norm.1} parent=5 // pred_check_branch
      %110 = sbr.rel (%p107) target = $region12
    $region11: #{l2norm.1} parent=5 // pred_region
      %s111 = ssub.s32 %s8, 1
      // Predicated region
      $region13: #{l2norm.1} parent=11 // pred_check
        %p112 = pneg %p41
      $region14: #{l2norm.1} parent=11 // pred_check_branch
        %114 = sbr.rel (%p112) target = $region16
      $region15: #{l2norm.1} parent=11 // pred_region
        _
      $region16: #{l2norm.1} parent=11 // pred_fallthru
        _
    $region12: #{l2norm.1} parent=5 // pred_fallthru
      _
    %p115 = scmp.lt.s32.totalorder %s8, 2
    // Predicated region
    $region17: #{l2norm.1} parent=5 // pred_check
      %p116 = pneg %p115
    $region18: #{l2norm.1} parent=5 // pred_check_branch
      %118 = sbr.rel (%p116) target = $region20
    $region19: #{l2norm.1} parent=5 // pred_region
      // Predicated region
      $region21: #{l2norm.1} parent=19 // pred_check
        %p119 = pneg %p63
      $region22: #{l2norm.1} parent=19 // pred_check_branch
        %121 = sbr.rel (%p119) target = $region24
      $region23: #{l2norm.1} parent=19 // pred_region
        %s122 = smul.u32 2, %s16
        %p123 = scmp.lt.s32.totalorder %s15, 1
        %s124 = scalar_select %p123, %s15, 1
        %p125 = scmp.lt.s32.totalorder %s122, 1
        %s126 = scalar_select %p125, %s122, 1
        %s127 = smul.addr %s124, 2
        %s128 = sadd.s32 %s126, %s127
        %s129 = smul.addr %s128, 4
        %s130 = scalar_lea.vmem %s1, %s129
        %s131 = smul.u32 2, %s16
      $region24: #{l2norm.1} parent=19 // pred_fallthru
        _
    $region20: #{l2norm.1} parent=5 // pred_fallthru
      _
    %p132 = scmp.le.s32.totalorder 1, %s8
    %p133 = scmp.lt.s32.totalorder %s8, 3
    %p134 = pnand %p132, %p133
    %p135 = pneg %p134
    // Predicated region
    $region25: #{l2norm.1} parent=5 // pred_check
      _
    $region26: #{l2norm.1} parent=5 // pred_check_branch
      %137 = sbr.rel (%p134) target = $region28
    $region27: #{l2norm.1} parent=5 // pred_region
      %s138 = ssub.s32 %s8, 1
      %p139 = pneg %p41
      %p140 = pneg %p38
      %s141 = smul.u32 2, %s18
      %p142 = scmp.lt.s32.totalorder %s17, 1
      %s143 = scalar_select %p142, %s17, 1
      %p144 = scmp.lt.s32.totalorder %s141, 1
      %s145 = scalar_select %p144, %s141, 1
      %s146 = smul.addr %s143, 2
      %s147 = sadd.s32 %s145, %s146
      %s148 = smul.addr %s147, 4
      %s149 = scalar_lea.vmem %s1, %s148
      %p150 = pneg %p69
      %p151 = pneg %p66
      %p152 = pneg %p97
      %p153 = pneg %p94
      %s154 = smul.u32 2, %s18
      %p155 = scmp.lt.s32.totalorder %s17, 1
      %s156 = scalar_select %p155, %s17, 1
      %p157 = scmp.lt.s32.totalorder %s154, 1
      %s158 = scalar_select %p157, %s154, 1
      %s159 = smul.addr %s156, 2
      %s160 = sadd.s32 %s158, %s159
      %s161 = smul.addr %s160, 4
      %s162 = scalar_lea.vmem %s2, %s161
      %s163 = smul.u32 2, %s18
      %p164 = scmp.lt.s32.totalorder %s17, 1
      %s165 = scalar_select %p164, %s17, 1
      %p166 = scmp.lt.s32.totalorder %s163, 1
      %s167 = scalar_select %p166, %s163, 1
      %s168 = smul.addr %s165, 2
      %s169 = sadd.s32 %s167, %s168
      %s170 = smul.addr %s169, 4
      %s171 = scalar_lea.vmem %s1, %s170
      %s172 = smul.u32 2, %s18
      %s173 = smul.u32 2, %s18
      %p174 = scmp.lt.s32.totalorder %s17, 1
      %s175 = scalar_select %p174, %s17, 1
      %p176 = scmp.lt.s32.totalorder %s173, 1
      %s177 = scalar_select %p176, %s173, 1
      %s178 = smul.addr %s175, 2
      %s179 = sadd.s32 %s177, %s178
      %s180 = smul.addr %s179, 4
      %s181 = scalar_lea.vmem %s2, %s180
      %s182 = smul.u32 2, %s18
      %v183 = vld [vmem:[%s171] sm:$0xff]
      %v184 = vld [vmem:[%s0] sm:$0xf]
      %v185 = vmul.f32 %v183, %v183
      %v187 = vcombine.high %v185, %v185
      %vm189 = vcmask 1043456
      %v190 = vsel %vm189, %v185, 0.0
      %v191 = vrot.slane %v190, 4
      %v192 = vadd.f32 %v190, %v191
      %v193 = vrot.slane %v192, 2
      %v194 = vadd.f32 %v192, %v193
      %v195 = vrot.slane %v194, 1
      %v196 = vadd.f32 %v194, %v195
      %v197 = vsel %vm189, %v187, 0.0
      %v198 = vrot.slane %v197, 4
      %v199 = vadd.f32 %v197, %v198
      %v200 = vrot.slane %v199, 2
      %v201 = vadd.f32 %v199, %v200
      %v202 = vrot.slane %v201, 1
      %v203 = vadd.f32 %v201, %v202
      %v204 = vrsqrt.pop %v196
      %v205 = vmul.f32 %v196, %v204
      %vm206 = vcmp.eq.f32.partialorder %v196, inf
      %v207 = vsel %vm206, %v196, %v205
      %vm208 = vcmp.eq.f32.partialorder %v196, 0.0
      %v209 = vand.u32 %v196, 2147483648
      %v210 = vsel %vm208, %v209, %v207
      %v211 = vrsqrt.pop %v203
      %v212 = vmul.f32 %v203, %v211
      %vm213 = vcmp.eq.f32.partialorder %v203, inf
      %v214 = vsel %vm213, %v203, %v212
      %vm215 = vcmp.eq.f32.partialorder %v203, 0.0
      %v216 = vand.u32 %v203, 2147483648
      %v217 = vsel %vm215, %v216, %v214
      %v218 = vadd.f32 %v210, 1e-10
      %v219 = vadd.f32 %v217, 1e-10
      %v220 = vrcp.pop %v218
      %v221 = vrcp.pop %v219
      %v224 = vcombine.low %v220, %v221
      %v226 = vmul.f32 %v183, %v224
      %228 = vset.pattern.permute.xlu0 0
      %229 = vperm.xlu0 %228, %v184
      %v230 = vpop.permute.xlu0 %229
      %v232 = vunpack.c.l.s4 839922192
      %v233 = vunpack.c.0.s8 %v232
      %v234 = vlaneseq
      %v235 = vshrl.u32 %v234, 7
      %v236 = vsub.s32 %v233, %v235
      %v237 = vrot.slane %v230, %v236
      %v239 = vmul.f32 %v226, %v237
      %240 = vst [vmem:[%s181] sm:$0xff] %v239
      %s241 = smul.u32 2, %s18
      %p242 = scmp.lt.s32.totalorder %s17, 1
      %s243 = scalar_select %p242, %s17, 1
      %p244 = scmp.lt.s32.totalorder %s241, 1
      %s245 = scalar_select %p244, %s241, 1
      %s246 = smul.addr %s243, 2
      %s247 = sadd.s32 %s245, %s246
      %s248 = smul.addr %s247, 4
      %s249 = scalar_lea.vmem %s2, %s248
      // Predicated region
      $region29: #{l2norm.1} parent=27 // pred_check
        %p250 = pneg %p94
      $region30: #{l2norm.1} parent=27 // pred_check_branch
        %252 = sbr.rel (%p250) target = $region32
      $region31: #{l2norm.1} parent=27 // pred_region
        %s253 = smul.u32 2, %s18
      $region32: #{l2norm.1} parent=27 // pred_fallthru
        _
    $region28: #{l2norm.1} parent=5 // pred_fallthru
      _
    %p254 = scmp.le.s32.totalorder 2, %s8
    // Predicated region
    $region33: #{l2norm.1} parent=5 // pred_check
      %p255 = pneg %p254
    $region34: #{l2norm.1} parent=5 // pred_check_branch
      %257 = sbr.rel (%p255) target = $region36
    $region35: #{l2norm.1} parent=5 // pred_region
      %s258 = ssub.s32 %s8, 2
      // Predicated region
      $region37: #{l2norm.1} parent=35 // pred_check
        %p259 = pneg %p100
      $region38: #{l2norm.1} parent=35 // pred_check_branch
        %261 = sbr.rel (%p259) target = $region40
      $region39: #{l2norm.1} parent=35 // pred_region
        %s262 = smul.u32 2, %s20
        %p263 = scmp.lt.s32.totalorder %s19, 1
        %s264 = scalar_select %p263, %s19, 1
        %p265 = scmp.lt.s32.totalorder %s262, 1
        %s266 = scalar_select %p265, %s262, 1
        %s267 = smul.addr %s264, 2
        %s268 = sadd.s32 %s266, %s267
        %s269 = smul.addr %s268, 4
        %s270 = scalar_lea.vmem %s2, %s269
      $region40: #{l2norm.1} parent=35 // pred_fallthru
        _
    $region36: #{l2norm.1} parent=5 // pred_fallthru
      _
  $region6: #{l2norm.1} parent=0 // loop_footer
    %s12 = sadd.s32 1, %s8
  $region7: #{l2norm.1} parent=0 // loop_footer_branch
    %7 = sbr.rel target = $region3
  $region8: #{l2norm.1} parent=0 // loop_exit
    _

</llo_original>
